<compile_context>
chip_gen: v5e
topology: v5e:2x2
jax: 0.10.0
libtpu: 0.0.40
codegen_flags: <defaults>
</compile_context>

<pallas_src>
import math

import jax
import jax.numpy as jnp
import numpy as np
from jax.experimental import pallas as pl
from jax.experimental.pallas import tpu as pltpu


_LANE = 128
_BLOCK_BUDGET = 2 * 1024 * 1024       # bytes of VMEM per x block (per buffer)
_MIN_GRID_STEPS = 8                   # keep both v7x TCs + DMA pipeline busy


def _sublane_quantum(itemsize):
    # sublane packing quantum by dtype width: f32 -> 8, bf16 -> 16, int8 -> 32
    return {4: 8, 2: 16, 1: 32}.get(itemsize, 8)


def _drop_path_kernel(mask_ref, x_ref, o_ref):
    """One grid step = one (sample, tile) block: out = x * mask[sample]."""
    m = mask_ref[pl.program_id(0)].astype(x_ref.dtype)    # scalar read (SMEM)
    o_ref[...] = x_ref[...] * m                           # native-dtype multiply


def _drop_path_residual_kernel(mask_ref, res_ref, x_ref, o_ref):
    """Fused residual: out = residual + x * mask[sample]."""
    m = mask_ref[pl.program_id(0)].astype(x_ref.dtype)
    o_ref[...] = res_ref[...] + x_ref[...] * m


def _aligned_layout(flat, itemsize, batch):
    """flat % 128 == 0: pick (lane, rows, rows_per_block).

    Prefer sublane-aligned rows (rows % quantum == 0) over the widest lane;
    cap the block at _BLOCK_BUDGET bytes; aim for >= _MIN_GRID_STEPS total
    grid steps so small batches still pipeline / use both v7x cores.
    """
    sub = _sublane_quantum(itemsize)
    lane = None
    for cand in (2048, 1024, 512, 256, 128):              # sublane-aligned first
        if flat % cand == 0 and (flat // cand) % sub == 0:
            lane = cand
            break
    if lane is None:                                       # lane-dense fallback
        for cand in (2048, 1024, 512, 256, 128):
            if flat % cand == 0:
                lane = cand
                break
    rows = flat // lane

    max_rows = max(sub, _BLOCK_BUDGET // (lane * itemsize))
    tiles_per_sample = max(1, -(-_MIN_GRID_STEPS // batch))
    target_rows = max(1, -(-rows // tiles_per_sample))

    rpb = min(rows, max_rows, target_rows)
    if rpb >= sub:
        rpb -= rpb % sub              # multiple of the sublane quantum (>= 8)
    elif rpb < rows:
        rpb = min(rows, sub)          # keep the block 8-divisible or full-dim
    return lane, rows, rpb


def _tail_layout(flat, itemsize, batch):
    """flat % 128 != 0: tile the flattened sample with a 128-multiple lane
    block and a masked tail (pl.cdiv grid).  The footprint accounts for the
    4 KiB-per-lane-tile padding of a (1, 1, tile) block."""
    if flat <= _LANE:
        return flat                                        # single full-dim block
    max_tile = max(_LANE, (_BLOCK_BUDGET // 4096) * _LANE)
    need = -(-flat // _LANE) * _LANE
    tiles_per_sample = max(1, -(-_MIN_GRID_STEPS // batch))
    target = -(-need // tiles_per_sample)
    target = max(_LANE, -(-target // _LANE) * _LANE)
    return min(need, max_tile, target)


def drop_path_pallas(x, *, drop_prob=0.0, training=False, scale_by_keep=True,
                     key=None, residual=None):
    """Pallas DropPath forward.  x: (B, ...); mask is per-sample.

    If `residual` is given (same shape/dtype as x), computes
    `residual + drop_path(x)` in a single fused pass.
    """
    if residual is not None:
        assert residual.shape == x.shape and residual.dtype == x.dtype

    if drop_prob == 0.0 or not training:                   # identity path
        return x if residual is None else residual + x

    if key is None:
        raise ValueError("drop_path_pallas: an explicit PRNG key is required "
                         "when training with drop_prob > 0.")

    keep_prob = 1.0 - drop_prob
    B = x.shape[0]
    flat = math.prod(x.shape[1:]) if x.ndim > 1 else 1
    itemsize = x.dtype.itemsize

    # Per-sample Bernoulli(keep_prob) decisions, computed once in plain JAX.
    keep = jax.random.bernoulli(key, p=keep_prob, shape=(B,))
    scale = (1.0 / keep_prob) if (scale_by_keep and keep_prob > 0.0) else 1.0
    mask = keep.astype(jnp.float32) * jnp.float32(scale)    # (B,) -> SMEM

    if flat % _LANE == 0:
        lane, rows, rpb = _aligned_layout(flat, itemsize, B)
        x3 = x.reshape(B, rows, lane)
        block = (1, rpb, lane)
        grid = (B, pl.cdiv(rows, rpb))
        index_map = lambda b, r: (b, r, 0)
    else:
        tile = _tail_layout(flat, itemsize, B)
        x3 = x.reshape(B, 1, flat)
        block = (1, 1, tile)
        grid = (B, pl.cdiv(flat, tile))
        index_map = lambda b, r: (b, 0, r)

    spec = pl.BlockSpec(block, index_map)
    smem_spec = pl.BlockSpec(memory_space=pltpu.MemorySpace.SMEM)

    n_tensors = 2 if residual is None else 3
    cost = pl.CostEstimate(
        flops=B * flat * (1 if residual is None else 2),
        transcendentals=0,
        bytes_accessed=n_tensors * B * flat * itemsize + B * 4)

    common = dict(
        out_shape=jax.ShapeDtypeStruct(x3.shape, x.dtype),
        grid=grid,
        out_specs=spec,
        compiler_params=pltpu.CompilerParams(
            dimension_semantics=("parallel", "parallel"),
            vmem_limit_bytes=32 * 1024 * 1024),
        cost_estimate=cost,
    )

    if residual is None:
        out = pl.pallas_call(
            _drop_path_kernel,
            in_specs=[smem_spec, spec],
            **common)(mask, x3)
    else:
        out = pl.pallas_call(
            _drop_path_residual_kernel,
            in_specs=[smem_spec, spec, spec],
            **common)(mask, residual.reshape(x3.shape), x3)

    return out.reshape(x.shape)


if __name__ == "__main__":
    root = jax.random.PRNGKey(0)
    kx, kres, kmask, kx2, kmask2 = jax.random.split(root, 5)

    drop_prob = 0.5
    keep_prob = 1.0 - drop_prob

    # --- main case: (B, N, D) as used inside the vim block ----------------
    B, N, D = 2, 8, 32
    x = jax.random.normal(kx, (B, N, D), dtype=jnp.float32)
    res = jax.random.normal(kres, (B, N, D), dtype=jnp.float32)

    y = drop_path_pallas(x, drop_prob=drop_prob, training=True,
                         scale_by_keep=True, key=kmask)
    y_fused = drop_path_pallas(x, drop_prob=drop_prob, training=True,
                               scale_by_keep=True, key=kmask, residual=res)
    y_eval = drop_path_pallas(x, drop_prob=drop_prob, training=False, key=kmask)
    jax.block_until_ready((y, y_fused, y_eval))

    keep = jax.random.bernoulli(kmask, p=keep_prob, shape=(B,))
    ref_mask = np.asarray(keep, np.float32) / keep_prob
    xn = np.asarray(x)
    y_ref = xn * ref_mask.reshape(B, 1, 1)

    yn = np.asarray(y)
    assert np.allclose(yn, y_ref, atol=1e-6), "mismatch vs reference"
    assert np.allclose(np.asarray(y_fused), np.asarray(res) + y_ref, atol=1e-6), \
        "fused residual mismatch"
    assert np.allclose(np.asarray(y_eval), xn), "eval mode should be identity"
    for b in range(B):
        kept = np.allclose(yn[b], xn[b] / keep_prob, atol=1e-5)
        dropped = np.allclose(yn[b], 0.0, atol=1e-6)
        assert kept or dropped, f"sample {b}: invalid DropPath mask"

    # --- odd-sized sample (flat % 128 != 0): masked-tail fallback ---------
    B2, N2, D2 = 2, 6, 25                       # flat = 150
    x2 = jax.random.normal(kx2, (B2, N2, D2), dtype=jnp.float32)
    y2 = drop_path_pallas(x2, drop_prob=drop_prob, training=True,
                          scale_by_keep=True, key=kmask2)
    y2 = jax.block_until_ready(y2)
    keep2 = jax.random.bernoulli(kmask2, p=keep_prob, shape=(B2,))
    ref2 = np.asarray(x2) * (np.asarray(keep2, np.float32)
                             / keep_prob).reshape(B2, 1, 1)
    assert np.allclose(np.asarray(y2), ref2, atol=1e-6), "tail-path mismatch"

    print("KERNEL_OK")
</pallas_src>

<mosaic_0001>
module attributes {stable_mosaic.version = 11 : i64} {
  func.func @_drop_path_kernel(%arg0: i32, %arg1: i32, %arg2: memref<2xf32, #tpu.memory_space<smem>>, %arg3: memref<1x1x256xf32, #tpu.memory_space<vmem>>, %arg4: memref<1x1x256xf32, #tpu.memory_space<vmem>>) attributes {dimension_semantics = [#tpu.dimension_semantics<parallel>, #tpu.dimension_semantics<parallel>], iteration_bounds = array<i64: 2, 1>, scalar_prefetch = 0 : i64, scratch_operands = 0 : i64, tpu.core_type = #tpu.core_type<tc>, window_params = [{transform_indices = @transform_0, window_bounds = array<i64: 2>}, {transform_indices = @transform_1, window_bounds = array<i64: 1, 1, 256>}, {transform_indices = @transform_2, window_bounds = array<i64: 1, 1, 256>}]} {
    %0 = arith.index_cast %arg0 : i32 to index
    %1 = memref.load %arg2[%0] : memref<2xf32, #tpu.memory_space<smem>>
    %c0 = arith.constant 0 : index
    %c0_0 = arith.constant 0 : index
    %c0_1 = arith.constant 0 : index
    %2 = vector.load %arg3[%c0, %c0_0, %c0_1] : memref<1x1x256xf32, #tpu.memory_space<vmem>>, vector<1x1x256xf32>
    %3 = vector.broadcast %1 : f32 to vector<1x1x256xf32>
    %4 = arith.mulf %2, %3 : vector<1x1x256xf32>
    %c0_2 = arith.constant 0 : index
    %c0_3 = arith.constant 0 : index
    %c0_4 = arith.constant 0 : index
    %5 = vector.load %arg4[%c0_2, %c0_3, %c0_4] : memref<1x1x256xf32, #tpu.memory_space<vmem>>, vector<1x1x256xf32>
    tpu.vector_store %arg4[%c0_2, %c0_3, %c0_4], %4 {strides = array<i32>} : memref<1x1x256xf32, #tpu.memory_space<vmem>>, vector<1x1x256xf32>,
    return
  }
  func.func @transform_0(%arg0: i32, %arg1: i32) -> i32 {
    %c0_i32 = arith.constant 0 : i32
    %c0_i32_0 = arith.constant 0 : i32
    return %c0_i32 : i32
  }
  func.func @transform_1(%arg0: i32, %arg1: i32) -> (i32, i32, i32) {
    %c0_i32 = arith.constant 0 : i32
    %c0_i32_0 = arith.constant 0 : i32
    return %arg0, %arg1, %c0_i32 : i32, i32, i32
  }
  func.func @transform_2(%arg0: i32, %arg1: i32) -> (i32, i32, i32) {
    %c0_i32 = arith.constant 0 : i32
    %c0_i32_0 = arith.constant 0 : i32
    return %arg0, %arg1, %c0_i32 : i32, i32, i32
  }
}

</mosaic_0001>

<llo_original>
// kernel: tpu_custom_call.1
$region0: #{tpu_custom_call.1}
  #allocation0 [shape = 'u32[]', space=smem, size = 0x4, offset = 0x4, fixed_abs, tag = 'smem constant byte address 0x4 - core index']
  #allocation1 [shape = 'u32[72,128]{1,0:T(1,128)}', space=vmem, size = 0x9000, scoped, tag = 'internal scratch']
  %s0 = inlined_call_operand.hbm [shape: f32[2], index: 0, kind: input, shape index: {}]
  %s1 = inlined_call_operand.hbm [shape: f32[2,1,256], index: 1, kind: input, shape index: {}]
  %s2 = inlined_call_operand.hbm [shape: f32[2,1,256], index: 2, kind: output, shape index: {}]
  %s3 = sld [smem:[#allocation0]]
  $region49: #{tpu_custom_call.1} parent=0
    _
  %s5 = ssub.s32 1, %s3
  %s6 = scalar_select 0, %s5, %s3
  $region1: #{tpu_custom_call.1} parent=0
    #allocation2 [shape = 'u8[512]{0}', space=smem, size = 0x200, scoped, tag = 'input window, operand 0, single buffered']
    #allocation3 [shape = 's32[2]{0}', space=sflag, size = 0x8, scoped, tag = 'scoped memory for tpu_custom_call.1']
    #allocation4 [shape = 's32[2]{0}', space=sflag, size = 0x8, scoped, tag = 'scoped memory for tpu_custom_call.1']
    #allocation5 [shape = 's32[2]{0}', space=sflag, size = 0x8, scoped, tag = 'scoped memory for tpu_custom_call.1']
    #allocation6 [shape = 'u8[2048]{0}', space=vmem, size = 0x800, scoped, tag = 'input window, operand 1']
    #allocation7 [shape = 'u8[2048]{0}', space=vmem, size = 0x800, scoped, tag = 'output window, operand 0']
    %7 = vsyncpa [#allocation5], 0
    %8 = vsyncpa [#allocation3], 0
    %s9 = scalar_lea.sflag [#allocation3], 1
    %10 = vsyncpa %s9, 0
    %11 = vsyncpa [#allocation4], 0
    %s12 = scalar_lea.sflag [#allocation4], 1
    %13 = vsyncpa %s12, 0
    loop: start=0, step=1, limit=4
    $region2: #{tpu_custom_call.1} parent=1 // loop_pre_header
      _
    $region3: #{tpu_custom_call.1} parent=1 // loop_header
      %s15 = sphi 0, %s19
      %p16 = scmp.ge.s32.totalorder %s15, 4
      %s22 = sphi 0, %s34
      %s23 = sphi 0, %s30
      %s24 = sphi 0, %s22
      %s25 = sphi 0, %s23
      %s26 = sphi 0, %s24
      %s27 = sphi 0, %s25
      %s35 = sphi 0, %s35
      %s37 = sphi 0, %s35
      %s38 = sphi 0, %s37
      %s52 = sphi 0, %s38
      %s60 = sphi 0, %s62
      %s63 = sphi 0, %s60
      %s64 = sphi 0, %s63
      %s80 = sphi 0, %s64
      %s88 = sphi 0, %s90
      %s91 = sphi 0, %s88
      %s92 = sphi 0, %s91
      %s108 = sphi 0, %s92
    $region4: #{tpu_custom_call.1} parent=1 // loop_header_branch
      %18 = sbr.rel (%p16) target = $region8
    $region5: #{tpu_custom_call.1} parent=1 // loop_body
      %s20 = ssub.s32 %s15, 1
      %s21 = ssub.s32 %s15, 2
      %s28 = sadd.s32 1, %s23
      %p29 = scmp.ge.s32.totalorder %s28, 1
      %s30 = scalar_select %p29, 0, %s28
      %s31 = sadd.s32 1, %s22
      %s32 = scalar_select %p29, %s31, %s22
      %p33 = scmp.ge.s32.totalorder %s32, 2
      %s34 = scalar_select %p33, 0, %s32
      %s36 = sadd.s32 %s35, 1
      %p39 = scmp.eq.s32.totalorder %s15, 1
      %p40 = scmp.ne.s32.totalorder %s35, %s37
      %p41 = scmp.eq.s32.totalorder %s15, 0
      %p42 = por %p40, %p41
      %p43 = scmp.ne.s32.totalorder %s35, %s37
      %p44 = scmp.eq.s32.totalorder %s20, 1
      %p45 = por %p43, %p44
      %p46 = scmp.ne.s32.totalorder %s37, %s38
      %p47 = scmp.eq.s32.totalorder %s20, 0
      %p48 = por %p46, %p47
      %p49 = scmp.ne.s32.totalorder %s37, %s38
      %p50 = scmp.eq.s32.totalorder %s21, 1
      %p51 = por %p49, %p50
      %p53 = scmp.ne.s32.totalorder %s38, %s52
      %p54 = scmp.eq.s32.totalorder %s21, 0
      %p55 = por %p53, %p54
      %s56 = ssub.s32 %s22, %s34
      %s57 = ssub.s32 %s23, %s30
      %s58 = sor.u32 %s56, %s57
      %p59 = scmp.eq.s32.totalorder %s58, 0
      %s61 = sadd.s32 %s60, 1
      %s62 = scalar_select %p59, %s60, %s61
      %p65 = pneg %p59
      %p66 = scmp.eq.s32.totalorder %s15, 1
      %p67 = por %p65, %p66
      %p68 = scmp.ne.s32.totalorder %s60, %s63
      %p69 = scmp.eq.s32.totalorder %s15, 0
      %p70 = por %p68, %p69
      %p71 = scmp.ne.s32.totalorder %s60, %s63
      %p72 = scmp.eq.s32.totalorder %s20, 1
      %p73 = por %p71, %p72
      %p74 = scmp.ne.s32.totalorder %s63, %s64
      %p75 = scmp.eq.s32.totalorder %s20, 0
      %p76 = por %p74, %p75
      %p77 = scmp.ne.s32.totalorder %s63, %s64
      %p78 = scmp.eq.s32.totalorder %s21, 1
      %p79 = por %p77, %p78
      %p81 = scmp.ne.s32.totalorder %s64, %s80
      %p82 = scmp.eq.s32.totalorder %s21, 0
      %p83 = por %p81, %p82
      %s84 = ssub.s32 %s22, %s34
      %s85 = ssub.s32 %s23, %s30
      %s86 = sor.u32 %s84, %s85
      %p87 = scmp.eq.s32.totalorder %s86, 0
      %s89 = sadd.s32 %s88, 1
      %s90 = scalar_select %p87, %s88, %s89
      %p93 = pneg %p87
      %p94 = scmp.eq.s32.totalorder %s15, 1
      %p95 = por %p93, %p94
      %p96 = scmp.ne.s32.totalorder %s88, %s91
      %p97 = scmp.eq.s32.totalorder %s15, 0
      %p98 = por %p96, %p97
      %p99 = scmp.ne.s32.totalorder %s88, %s91
      %p100 = scmp.eq.s32.totalorder %s20, 1
      %p101 = por %p99, %p100
      %p102 = scmp.ne.s32.totalorder %s91, %s92
      %p103 = scmp.eq.s32.totalorder %s20, 0
      %p104 = por %p102, %p103
      %p105 = scmp.ne.s32.totalorder %s91, %s92
      %p106 = scmp.eq.s32.totalorder %s21, 1
      %p107 = por %p105, %p106
      %p109 = scmp.ne.s32.totalorder %s92, %s108
      %p110 = scmp.eq.s32.totalorder %s21, 0
      %p111 = por %p109, %p110
      %p112 = scmp.le.s32.totalorder 1, %s15
      %p113 = scmp.lt.s32.totalorder %s15, 3
      %p114 = pnand %p112, %p113
      %p115 = pneg %p114
      // Predicated region
      $region9: #{tpu_custom_call.1} parent=5 // pred_check
        _
      $region10: #{tpu_custom_call.1} parent=5 // pred_check_branch
        %117 = sbr.rel (%p114) target = $region12
      $region11: #{tpu_custom_call.1} parent=5 // pred_region
        %s118 = ssub.s32 %s15, 1
        // Predicated region
        $region13: #{tpu_custom_call.1} parent=11 // pred_check
          %p119 = pneg %p48
        $region14: #{tpu_custom_call.1} parent=11 // pred_check_branch
          %121 = sbr.rel (%p119) target = $region16
        $region15: #{tpu_custom_call.1} parent=11 // pred_region
          %123 = vsyncadd [#allocation5], 0
          %s125 = sshll.u32 %s0, 4
          %s126 = int_to_ptr.hbm [resolvable:$true] %s125
          %128 = dma.hbm_to_smem %s126, 16, [#allocation2], [#allocation5]
        $region16: #{tpu_custom_call.1} parent=11 // pred_fallthru
          _
      $region12: #{tpu_custom_call.1} parent=5 // pred_fallthru
        _
      %p129 = scmp.lt.s32.totalorder %s15, 2
      // Predicated region
      $region17: #{tpu_custom_call.1} parent=5 // pred_check
        %p130 = pneg %p129
      $region18: #{tpu_custom_call.1} parent=5 // pred_check_branch
        %132 = sbr.rel (%p130) target = $region20
      $region19: #{tpu_custom_call.1} parent=5 // pred_region
        // Predicated region
        $region21: #{tpu_custom_call.1} parent=19 // pred_check
          %p133 = pneg %p70
        $region22: #{tpu_custom_call.1} parent=19 // pred_check_branch
          %135 = sbr.rel (%p133) target = $region24
        $region23: #{tpu_custom_call.1} parent=19 // pred_region
          %s136 = sand.u32 %s60, 1
          %s137 = scalar_lea.sflag [#allocation3], %s136
          %s138 = sand.u32 %s60, 1
          %s139 = smul.addr %s138, 2
          %s140 = scalar_lea.vmem [#allocation6], %s139
          %142 = vsyncadd %s137, 0
          %s143 = smul.addr %s23, 2
          %s144 = smul.addr %s22, 2
          %s145 = sadd.s32 %s143, %s144
          %s146 = scalar_lea.hbm %s1, %s145
          %s148 = sshll.u32 %s146, 4
          %s149 = int_to_ptr.hbm [resolvable:$true] %s148
          %s150 = sshll.u32 %s140, 4
          %s151 = int_to_ptr.vmem [resolvable:$true] %s150
          %153 = dma.hbm_to_vmem [thread:$0]  %s149, 32, %s151, %s137
        $region24: #{tpu_custom_call.1} parent=19 // pred_fallthru
          _
      $region20: #{tpu_custom_call.1} parent=5 // pred_fallthru
        _
      %p154 = scmp.le.s32.totalorder 1, %s15
      %p155 = scmp.lt.s32.totalorder %s15, 3
      %p156 = pnand %p154, %p155
      %p157 = pneg %p156
      // Predicated region
      $region25: #{tpu_custom_call.1} parent=5 // pred_check
        _
      $region26: #{tpu_custom_call.1} parent=5 // pred_check_branch
        %159 = sbr.rel (%p156) target = $region28
      $region27: #{tpu_custom_call.1} parent=5 // pred_region
        %s160 = ssub.s32 %s15, 1
        // Predicated region
        $region29: #{tpu_custom_call.1} parent=27 // pred_check
          %p161 = pneg %p48
        $region30: #{tpu_custom_call.1} parent=27 // pred_check_branch
          %163 = sbr.rel (%p161) target = $region32
        $region31: #{tpu_custom_call.1} parent=27 // pred_region
          %165 = dma.done [#allocation5], 16
        $region32: #{tpu_custom_call.1} parent=27 // pred_fallthru
          _
        %s166 = sand.u32 %s63, 1
        %s167 = scalar_lea.sflag [#allocation3], %s166
        %s168 = sand.u32 %s63, 1
        %s169 = smul.addr %s168, 2
        %s170 = scalar_lea.vmem [#allocation6], %s169
        // Predicated region
        $region33: #{tpu_custom_call.1} parent=27 // pred_check
          %p171 = pneg %p76
        $region34: #{tpu_custom_call.1} parent=27 // pred_check_branch
          %173 = sbr.rel (%p171) target = $region36
        $region35: #{tpu_custom_call.1} parent=27 // pred_region
          %175 = dma.done %s167, 32
        $region36: #{tpu_custom_call.1} parent=27 // pred_fallthru
          _
        %176 = sfence
        %p177 = pneg %p48
        %p178 = pneg %p45
        %s179 = sand.u32 %s63, 1
        %s180 = scalar_lea.sflag [#allocation3], %s179
        %s181 = sand.u32 %s63, 1
        %s182 = smul.addr %s181, 2
        %s183 = scalar_lea.vmem [#allocation6], %s182
        %p184 = pneg %p76
        %p185 = pneg %p73
        %p186 = pneg %p104
        %p187 = pneg %p101
        %s188 = sand.u32 %s91, 1
        %s189 = scalar_lea.sflag [#allocation4], %s188
        %s190 = sand.u32 %s91, 1
        %s191 = smul.addr %s190, 2
        %s192 = scalar_lea.vmem [#allocation7], %s191
        %s193 = sld [smem:[#allocation2 + %s24]]
        %v194 = vld [vmem:[%s170] sm:$0x3]
        %v195 = vstv %s193
        %v196 = vmul.f32 %v194, %v195
        %v197 = vlaneseq
        %vm198 = vcmp.ge.s32.totalorder %v197, 0
        %vm199 = vcmp.lt.s32.totalorder %v197, 256
        %vm200 = vmand %vm198, %vm199
        %201 = vst.msk [vmem:[%s192] sm:$0x3] %vm200, %v196
        %s202 = sand.u32 %s91, 1
        %s203 = scalar_lea.sflag [#allocation4], %s202
        %s204 = sand.u32 %s91, 1
        %s205 = smul.addr %s204, 2
        %s206 = scalar_lea.vmem [#allocation7], %s205
        // Predicated region
        $region37: #{tpu_custom_call.1} parent=27 // pred_check
          %p207 = pneg %p101
        $region38: #{tpu_custom_call.1} parent=27 // pred_check_branch
          %209 = sbr.rel (%p207) target = $region40
        $region39: #{tpu_custom_call.1} parent=27 // pred_region
          %211 = vsyncadd %s203, 0
          %s212 = smul.addr %s25, 2
          %s213 = smul.addr %s24, 2
          %s214 = sadd.s32 %s212, %s213
          %s215 = scalar_lea.hbm %s2, %s214
          %s217 = sshll.u32 %s206, 4
          %s218 = int_to_ptr.vmem [resolvable:$true] %s217
          %s219 = sshll.u32 %s215, 4
          %s220 = int_to_ptr.hbm [resolvable:$true] %s219
          %222 = dma.vmem_to_hbm [thread:$0]  %s218, 32, %s220, %s203
        $region40: #{tpu_custom_call.1} parent=27 // pred_fallthru
          _
      $region28: #{tpu_custom_call.1} parent=5 // pred_fallthru
        _
      %p223 = scmp.le.s32.totalorder 2, %s15
      // Predicated region
      $region41: #{tpu_custom_call.1} parent=5 // pred_check
        %p224 = pneg %p223
      $region42: #{tpu_custom_call.1} parent=5 // pred_check_branch
        %226 = sbr.rel (%p224) target = $region44
      $region43: #{tpu_custom_call.1} parent=5 // pred_region
        %s227 = ssub.s32 %s15, 2
        // Predicated region
        $region45: #{tpu_custom_call.1} parent=43 // pred_check
          %p228 = pneg %p107
        $region46: #{tpu_custom_call.1} parent=43 // pred_check_branch
          %230 = sbr.rel (%p228) target = $region48
        $region47: #{tpu_custom_call.1} parent=43 // pred_region
          %s231 = sand.u32 %s92, 1
          %s232 = scalar_lea.sflag [#allocation4], %s231
          %s233 = sand.u32 %s92, 1
          %s234 = smul.addr %s233, 2
          %s235 = scalar_lea.vmem [#allocation7], %s234
          %237 = dma.done %s232, 32
        $region48: #{tpu_custom_call.1} parent=43 // pred_fallthru
          _
      $region44: #{tpu_custom_call.1} parent=5 // pred_fallthru
        _
    $region6: #{tpu_custom_call.1} parent=1 // loop_footer
      %s19 = sadd.s32 1, %s15
    $region7: #{tpu_custom_call.1} parent=1 // loop_footer_branch
      %14 = sbr.rel target = $region3
    $region8: #{tpu_custom_call.1} parent=1 // loop_exit
      _
    %238 = vsyncpa [#allocation3], 1
    %s239 = scalar_lea.sflag [#allocation3], 1
    %240 = vsyncpa %s239, 1
    %241 = vsyncpa [#allocation4], 1
    %s242 = scalar_lea.sflag [#allocation4], 1
    %243 = vsyncpa %s242, 1
    %244 = vsyncpa [#allocation5], 1
    %s245 = scalar_lea.sflag [#allocation5], 1
    %246 = vsyncpa %s245, 1

</llo_original>
